<compile_context>
chip_gen: v7x
topology: tpu7x:2x2x1
jax: 0.10.0
libtpu: 0.0.40
codegen_flags: <defaults>
</compile_context>

<pallas_src>
import math
from functools import partial

import jax
import jax.numpy as jnp
from jax import lax
from jax.experimental import pallas as pl
from jax.experimental.pallas import tpu as pltpu


def _pick_tile(n, target):
    """Largest divisor of n that is <= target and a multiple of 8, else n."""
    for t in range(min(n, target), 7, -1):
        if n % t == 0 and t % 8 == 0:
            return t
    return n


# ----------------------------------------------------------------------------
# Kernel 1: encode (patch conv as matmul) fused with GroupNorm statistics.
# grid = (B, N_tiles); N axis is an accumulation ("arbitrary") axis.
# ----------------------------------------------------------------------------
def _encode_gn_kernel(x_ref, w_ref, b_ref, y_ref, mean_ref, rstd_ref,
                      sum_sc, ssq_sc, *, n_total):
    ni = pl.program_id(1)

    @pl.when(ni == 0)
    def _():
        sum_sc[...] = jnp.zeros_like(sum_sc)
        ssq_sc[...] = jnp.zeros_like(ssq_sc)

    y = (jnp.dot(x_ref[0], w_ref[...], preferred_element_type=jnp.float32)
         + b_ref[...])                                     # (tn, D)
    y_ref[0] = y.astype(y_ref.dtype)
    sum_sc[...] += jnp.sum(y, axis=0, keepdims=True)
    ssq_sc[...] += jnp.sum(y * y, axis=0, keepdims=True)

    @pl.when(ni == pl.num_programs(1) - 1)
    def _():
        inv_n = 1.0 / n_total
        mean = sum_sc[...] * inv_n
        var = ssq_sc[...] * inv_n - mean * mean
        mean_ref[0] = mean
        rstd_ref[0] = lax.rsqrt(var + 1e-5)                # GroupNorm eps


def encode_groupnorm(xp, w_t, b):
    """xp: (B, Np, Cin*p*p); w_t: (Cin*p*p, D) pre-transposed; b: (D,)."""
    B, Np, Cin_p = xp.shape
    D = w_t.shape[1]
    tn = _pick_tile(Np, 512)
    kern = partial(_encode_gn_kernel, n_total=float(Np))
    return pl.pallas_call(
        kern,
        out_shape=(jax.ShapeDtypeStruct((B, Np, D), xp.dtype),
                   jax.ShapeDtypeStruct((B, 1, D), jnp.float32),
                   jax.ShapeDtypeStruct((B, 1, D), jnp.float32)),
        grid_spec=pltpu.PrefetchScalarGridSpec(
            num_scalar_prefetch=0,
            grid=(B, Np // tn),
            in_specs=[
                pl.BlockSpec((1, tn, Cin_p), lambda b_, n_: (b_, n_, 0)),
                pl.BlockSpec((Cin_p, D), lambda b_, n_: (0, 0)),
                pl.BlockSpec((1, D), lambda b_, n_: (0, 0)),
            ],
            out_specs=[
                pl.BlockSpec((1, tn, D), lambda b_, n_: (b_, n_, 0)),
                pl.BlockSpec((1, 1, D), lambda b_, n_: (b_, 0, 0)),
                pl.BlockSpec((1, 1, D), lambda b_, n_: (b_, 0, 0)),
            ],
            scratch_shapes=[pltpu.VMEM((1, D), jnp.float32),
                            pltpu.VMEM((1, D), jnp.float32)]),
        compiler_params=pltpu.CompilerParams(
            dimension_semantics=("parallel", "arbitrary")),
    )(xp, w_t, b.reshape(1, D))


# ----------------------------------------------------------------------------
# Kernel 2: plain 1x1 conv (decode), tiled over N, weights resident.
# ----------------------------------------------------------------------------
def _conv1x1_kernel(x_ref, w_ref, b_ref, o_ref):
    o_ref[0] = (jnp.dot(x_ref[0], w_ref[...], preferred_element_type=jnp.float32)
                + b_ref[...]).astype(o_ref.dtype)


def conv1x1(x, w_t, b):
    """x: (B, Np, Cin); w_t: (Cin, Cout) pre-transposed; b: (Cout,)."""
    B, Np, Cin = x.shape
    Cout = w_t.shape[1]
    tn = _pick_tile(Np, 512)
    return pl.pallas_call(
        _conv1x1_kernel,
        out_shape=jax.ShapeDtypeStruct((B, Np, Cout), x.dtype),
        grid_spec=pltpu.PrefetchScalarGridSpec(
            num_scalar_prefetch=0,
            grid=(B, Np // tn),
            in_specs=[
                pl.BlockSpec((1, tn, Cin), lambda b_, n_: (b_, n_, 0)),
                pl.BlockSpec((Cin, Cout), lambda b_, n_: (0, 0)),
                pl.BlockSpec((1, Cout), lambda b_, n_: (0, 0)),
            ],
            out_specs=pl.BlockSpec((1, tn, Cout), lambda b_, n_: (b_, n_, 0)),
        ),
        compiler_params=pltpu.CompilerParams(
            dimension_semantics=("parallel", "parallel")),
    )(x, w_t, b.reshape(1, Cout))


# ----------------------------------------------------------------------------
# Kernel 3: fused multi-head flash attention.
#   grid = (B, q_tiles, kv_tiles); kv axis "arbitrary" (online softmax).
#   GroupNorm is applied on the fly from per-batch (mean, rstd); gamma/beta
#   and 1/sqrt(D) already folded into the fused, pre-transposed weights.
#   Output: (B, N, n_heads*D) lane-dense.
# ----------------------------------------------------------------------------
def _mha_flash_kernel(yq_ref, ykv_ref, mean_ref, rstd_ref,
                      wq_ref, bq_ref, wkv_ref, bkv_ref, wo_ref, bo_ref,
                      o_ref, q_sc, m_sc, l_sc, acc_sc, *, n_heads, d):
    ki = pl.program_id(2)
    mean = mean_ref[0]                                     # (1, D)
    rstd = rstd_ref[0]                                     # (1, D)
    hd = n_heads * d

    @pl.when(ki == 0)
    def _init():
        xq = (yq_ref[0] - mean) * rstd                     # (tq, D) normalized
        q_sc[...] = (jnp.dot(xq, wq_ref[...],
                             preferred_element_type=jnp.float32) + bq_ref[...])
        m_sc[...] = jnp.full(m_sc.shape, -jnp.inf, jnp.float32)
        l_sc[...] = jnp.zeros_like(l_sc)
        acc_sc[...] = jnp.zeros_like(acc_sc)

    # Project K and V for all heads of this kv tile in one wide matmul.
    xkv = (ykv_ref[0] - mean) * rstd                       # (tk, D)
    kv = (jnp.dot(xkv, wkv_ref[...],
                  preferred_element_type=jnp.float32) + bkv_ref[...])  # (tk, 2*hd)
    q_all = q_sc[...]                                      # (tq, hd)

    for h in range(n_heads):                               # static unroll
        q_h = q_all[:, h * d:(h + 1) * d]                  # (tq, d), scale folded
        k_h = kv[:, h * d:(h + 1) * d]                     # (tk, d)
        v_h = kv[:, hd + h * d:hd + (h + 1) * d]           # (tk, d)
        s = lax.dot_general(q_h, k_h, (((1,), (1,)), ((), ())),
                            preferred_element_type=jnp.float32)  # (tq, tk)
        m_prev = m_sc[h]                                   # (tq, 1)
        m_new = jnp.maximum(m_prev, jnp.max(s, axis=-1, keepdims=True))
        alpha = jnp.exp(m_prev - m_new)
        p = jnp.exp(s - m_new)
        l_sc[h] = alpha * l_sc[h] + jnp.sum(p, axis=-1, keepdims=True)
        acc_sc[h] = alpha * acc_sc[h] + jnp.dot(
            p, v_h, preferred_element_type=jnp.float32)
        m_sc[h] = m_new

    @pl.when(ki == pl.num_programs(2) - 1)
    def _finalize():
        outs = []
        for h in range(n_heads):
            att = acc_sc[h] / l_sc[h]                      # normalize post P@V
            outs.append(jnp.dot(att, wo_ref[h],
                                preferred_element_type=jnp.float32))
        out = jnp.concatenate(outs, axis=-1) + bo_ref[...]  # (tq, hd)
        o_ref[0] = out.astype(o_ref.dtype)


def mha_flash(y, mean, rstd, wq_all, bq_all, wkv_all, bkv_all, wo_t, bo_all,
              *, n_heads, d):
    B, Np, D = y.shape
    hd = n_heads * d
    tq = _pick_tile(Np, 128)
    tk = _pick_tile(Np, 128)
    kern = partial(_mha_flash_kernel, n_heads=n_heads, d=d)
    return pl.pallas_call(
        kern,
        out_shape=jax.ShapeDtypeStruct((B, Np, hd), y.dtype),
        grid_spec=pltpu.PrefetchScalarGridSpec(
            num_scalar_prefetch=0,
            grid=(B, Np // tq, Np // tk),
            in_specs=[
                pl.BlockSpec((1, tq, D), lambda b, qi, ki: (b, qi, 0)),   # y (q side)
                pl.BlockSpec((1, tk, D), lambda b, qi, ki: (b, ki, 0)),   # y (kv side)
                pl.BlockSpec((1, 1, D), lambda b, qi, ki: (b, 0, 0)),     # mean
                pl.BlockSpec((1, 1, D), lambda b, qi, ki: (b, 0, 0)),     # rstd
                pl.BlockSpec((D, hd), lambda b, qi, ki: (0, 0)),          # Wq (fused)
                pl.BlockSpec((1, hd), lambda b, qi, ki: (0, 0)),          # bq
                pl.BlockSpec((D, 2 * hd), lambda b, qi, ki: (0, 0)),      # Wkv (fused)
                pl.BlockSpec((1, 2 * hd), lambda b, qi, ki: (0, 0)),      # bkv
                pl.BlockSpec((n_heads, d, d), lambda b, qi, ki: (0, 0, 0)),  # Wo^T
                pl.BlockSpec((1, hd), lambda b, qi, ki: (0, 0)),          # bo
            ],
            out_specs=pl.BlockSpec((1, tq, hd), lambda b, qi, ki: (b, qi, 0)),
            scratch_shapes=[
                pltpu.VMEM((tq, hd), jnp.float32),           # q for all heads
                pltpu.VMEM((n_heads, tq, 1), jnp.float32),   # m
                pltpu.VMEM((n_heads, tq, 1), jnp.float32),   # l
                pltpu.VMEM((n_heads, tq, d), jnp.float32),   # acc
            ]),
        compiler_params=pltpu.CompilerParams(
            dimension_semantics=("parallel", "parallel", "arbitrary")),
    )(y, y, mean, rstd, wq_all, bq_all, wkv_all, bkv_all, wo_t, bo_all)


# ----------------------------------------------------------------------------
# Full forward (glue + kernels)
# ----------------------------------------------------------------------------
def forward(x, params, patch_size=1):
    B, Cin, H, W = x.shape
    p = patch_size
    Hp, Wp = H // p, W // p
    Np = Hp * Wp
    n_heads, D, _ = params["wq"].shape
    Cout = params["dec_w"].shape[0]
    hd = n_heads * D

    # encode: patch conv == space-to-depth + matmul (patch flatten order (c,i,j)
    # matches the OIHW weight flatten order); fused with GroupNorm stats.
    xp = x.reshape(B, Cin, Hp, p, Wp, p)
    xp = xp.transpose(0, 2, 4, 1, 3, 5).reshape(B, Np, Cin * p * p)
    w_enc_t = params["enc_w"].reshape(D, Cin * p * p).T
    y, mean, rstd = encode_groupnorm(xp, w_enc_t, params["enc_b"])

    # Fold per-head GroupNorm affine + 1/sqrt(D) into pre-transposed fused
    # QKV weights (tiny wrapper-side math).
    g = params["gamma"][:, 0, :]                           # (nH, D)
    be = params["beta"][:, 0, :]                           # (nH, D)

    def fold(w, b):    # w: (nH, Dout, Din) torch layout, b: (nH, 1, Dout)
        w_t = jnp.transpose(w, (0, 2, 1))                  # (nH, Din, Dout)
        w_eff = w_t * g[:, :, None]
        b_eff = jnp.einsum("hi,hio->ho", be, w_t) + b[:, 0, :]
        return w_eff, b_eff

    wq_e, bq_e = fold(params["wq"], params["bq"])
    wk_e, bk_e = fold(params["wk"], params["bk"])
    wv_e, bv_e = fold(params["wv"], params["bv"])
    scale = 1.0 / math.sqrt(D)
    wq_e, bq_e = wq_e * scale, bq_e * scale

    def cat_heads(w_e):  # (nH, Din, Dout) -> (Din, nH*Dout)
        return jnp.transpose(w_e, (1, 0, 2)).reshape(D, hd)

    wq_all = cat_heads(wq_e)
    bq_all = bq_e.reshape(1, hd)
    wkv_all = jnp.concatenate([cat_heads(wk_e), cat_heads(wv_e)], axis=1)
    bkv_all = jnp.concatenate([bk_e.reshape(1, hd), bv_e.reshape(1, hd)], axis=1)
    wo_t = jnp.transpose(params["wo"], (0, 2, 1))          # (nH, Din, Dout)
    bo_all = params["bo"][:, 0, :].reshape(1, hd)

    # fused flash attention over all heads -> (B, Np, nH*D), lane-dense.
    att = mha_flash(y, mean, rstd, wq_all, bq_all, wkv_all, bkv_all,
                    wo_t, bo_all, n_heads=n_heads, d=D)

    # decode (1x1) BEFORE nearest upsample (they commute); upsample the small
    # Cout-channel result only.
    dec = conv1x1(att, params["dec_w"].T, params["dec_b"])  # (B, Np, Cout)
    out = dec.reshape(B, Hp, Wp, Cout).transpose(0, 3, 1, 2)
    if p > 1:
        out = jnp.repeat(jnp.repeat(out, p, axis=2), p, axis=3)
    return out


# ----------------------------------------------------------------------------
# Pure-JAX reference (follows the PyTorch code in NCHW) for verification
# ----------------------------------------------------------------------------
def ref_forward(x, params, patch_size, n_heads):
    p = patch_size
    dn = ("NCHW", "OIHW", "NCHW")
    y = lax.conv_general_dilated(x, params["enc_w"], (p, p), "VALID",
                                 dimension_numbers=dn)
    y = y + params["enc_b"][None, :, None, None]
    B, D, H, W = y.shape
    outs = []
    for h in range(n_heads):
        mean = y.mean(axis=(2, 3), keepdims=True)
        var = ((y - mean) ** 2).mean(axis=(2, 3), keepdims=True)
        xn = (y - mean) / jnp.sqrt(var + 1e-5)
        xn = xn * params["gamma"][h, 0][None, :, None, None] \
                + params["beta"][h, 0][None, :, None, None]

        def c1(inp, w, b):
            o = lax.conv_general_dilated(inp, w[:, :, None, None], (1, 1),
                                         "VALID", dimension_numbers=dn)
            return o + b[None, :, None, None]

        Q = c1(xn, params["wq"][h], params["bq"][h, 0])
        K = c1(xn, params["wk"][h], params["bk"][h, 0])
        V = c1(xn, params["wv"][h], params["bv"][h, 0])
        Qf = Q.reshape(B, D, H * W).transpose(0, 2, 1)
        Kf = K.reshape(B, D, H * W)
        aff = jnp.einsum("bnd,bdm->bnm", Qf, Kf) / jnp.sqrt(jnp.float32(D))
        aff = jax.nn.softmax(aff, axis=2)
        Vf = V.reshape(B, D, H * W).transpose(0, 2, 1)
        att = jnp.einsum("bnm,bmd->bnd", aff, Vf)
        att = att.transpose(0, 2, 1).reshape(B, D, H, W)
        outs.append(c1(att, params["wo"][h], params["bo"][h, 0]))
    cat = jnp.concatenate(outs, axis=1)
    up = jnp.repeat(jnp.repeat(cat, p, axis=2), p, axis=3)
    out = lax.conv_general_dilated(up, params["dec_w"][:, :, None, None],
                                   (1, 1), "VALID", dimension_numbers=dn)
    return out + params["dec_b"][None, :, None, None]


if __name__ == "__main__":
    def make_params(key, Cin, Cout, n_heads, D, p):
        keys = jax.random.split(key, 16)
        rnd = lambda k, shape, s=0.1: s * jax.random.normal(k, shape, jnp.float32)
        return dict(
            enc_w=rnd(keys[0], (D, Cin, p, p)),
            enc_b=rnd(keys[1], (D,)),
            gamma=1.0 + rnd(keys[2], (n_heads, 1, D)),
            beta=rnd(keys[3], (n_heads, 1, D)),
            wq=rnd(keys[4], (n_heads, D, D)),
            bq=rnd(keys[5], (n_heads, 1, D)),
            wk=rnd(keys[6], (n_heads, D, D)),
            bk=rnd(keys[7], (n_heads, 1, D)),
            wv=rnd(keys[8], (n_heads, D, D)),
            bv=rnd(keys[9], (n_heads, 1, D)),
            wo=rnd(keys[10], (n_heads, D, D)),
            bo=rnd(keys[11], (n_heads, 1, D)),
            dec_w=rnd(keys[12], (Cout, n_heads * D)),
            dec_b=rnd(keys[13], (Cout,)),
        )

    B, Cin, H, W = 2, 4, 16, 16
    Cout, n_heads, D = 4, 2, 32
    key = jax.random.PRNGKey(0)
    k1, k2, kx1, kx2 = jax.random.split(key, 4)

    # config 1: patch_size=1 -> N=256, kv tiles of 128 (exercises online softmax)
    params1 = make_params(k1, Cin, Cout, n_heads, D, 1)
    x1 = jax.random.normal(kx1, (B, Cin, H, W), dtype=jnp.float32)
    out1 = jax.block_until_ready(forward(x1, params1, patch_size=1))
    ref1 = ref_forward(x1, params1, 1, n_heads)
    assert out1.shape == (B, Cout, H, W), out1.shape
    err1 = float(jnp.max(jnp.abs(out1 - ref1)))
    assert jnp.allclose(out1, ref1, rtol=1e-3, atol=1e-3), f"max abs err {err1}"

    # config 2: patch_size=2 -> exercises patch encode + decode-before-upsample
    params2 = make_params(k2, Cin, Cout, n_heads, D, 2)
    x2 = jax.random.normal(kx2, (B, Cin, H, W), dtype=jnp.float32)
    out2 = jax.block_until_ready(forward(x2, params2, patch_size=2))
    ref2 = ref_forward(x2, params2, 2, n_heads)
    assert out2.shape == (B, Cout, H, W), out2.shape
    err2 = float(jnp.max(jnp.abs(out2 - ref2)))
    assert jnp.allclose(out2, ref2, rtol=1e-3, atol=1e-3), f"max abs err {err2}"

    print("KERNEL_OK")
</pallas_src>

<mosaic_0001>
module attributes {stable_mosaic.version = 11 : i64} {
  func.func @_encode_gn_kernel(%arg0: i32, %arg1: i32, %arg2: memref<1x256x4xf32, #tpu.memory_space<vmem>>, %arg3: memref<4x32xf32, #tpu.memory_space<vmem>>, %arg4: memref<1x32xf32, #tpu.memory_space<vmem>>, %arg5: memref<1x256x32xf32, #tpu.memory_space<vmem>>, %arg6: memref<1x1x32xf32, #tpu.memory_space<vmem>>, %arg7: memref<1x1x32xf32, #tpu.memory_space<vmem>>, %arg8: memref<1x32xf32, #tpu.memory_space<vmem>>, %arg9: memref<1x32xf32, #tpu.memory_space<vmem>>) attributes {dimension_semantics = [#tpu.dimension_semantics<parallel>, #tpu.dimension_semantics<arbitrary>], iteration_bounds = array<i64: 2, 1>, scalar_prefetch = 0 : i64, scratch_operands = 2 : i64, tpu.core_type = #tpu.core_type<tc>, window_params = [{transform_indices = @transform_0, window_bounds = array<i64: 1, 256, 4>}, {pipeline_mode = #tpu.pipeline_mode<synchronous>, transform_indices = @transform_1, window_bounds = array<i64: 4, 32>}, {pipeline_mode = #tpu.pipeline_mode<synchronous>, transform_indices = @transform_2, window_bounds = array<i64: 1, 32>}, {transform_indices = @transform_3, window_bounds = array<i64: 1, 256, 32>}, {transform_indices = @transform_4, window_bounds = array<i64: 1, 1, 32>}, {transform_indices = @transform_5, window_bounds = array<i64: 1, 1, 32>}]} {
    %c0_i32 = arith.constant 0 : i32
    %0 = arith.cmpi eq, %arg1, %c0_i32 : i32
    %1 = arith.extui %0 : i1 to i32
    %c0_i32_0 = arith.constant 0 : i32
    %2 = arith.cmpi ne, %1, %c0_i32_0 : i32
    scf.if %2 {
      %cst_22 = arith.constant 0.000000e+00 : f32
      %27 = vector.broadcast %cst_22 : f32 to vector<1x32xf32>
      %c0_23 = arith.constant 0 : index
      %c0_24 = arith.constant 0 : index
      %28 = vector.load %arg8[%c0_23, %c0_24] : memref<1x32xf32, #tpu.memory_space<vmem>>, vector<1x32xf32>
      tpu.vector_store %arg8[%c0_23, %c0_24], %27 {strides = array<i32>} : memref<1x32xf32, #tpu.memory_space<vmem>>, vector<1x32xf32>,
      %cst_25 = arith.constant 0.000000e+00 : f32
      %29 = vector.broadcast %cst_25 : f32 to vector<1x32xf32>
      %c0_26 = arith.constant 0 : index
      %c0_27 = arith.constant 0 : index
      %30 = vector.load %arg9[%c0_26, %c0_27] : memref<1x32xf32, #tpu.memory_space<vmem>>, vector<1x32xf32>
      tpu.vector_store %arg9[%c0_26, %c0_27], %29 {strides = array<i32>} : memref<1x32xf32, #tpu.memory_space<vmem>>, vector<1x32xf32>,
    } else {
    }
    %c0 = arith.constant 0 : index
    %c0_1 = arith.constant 0 : index
    %c0_2 = arith.constant 0 : index
    %3 = vector.load %arg2[%c0, %c0_1, %c0_2] : memref<1x256x4xf32, #tpu.memory_space<vmem>>, vector<1x256x4xf32>
    %4 = vector.shape_cast %3 : vector<1x256x4xf32> to vector<256x4xf32>
    %c0_3 = arith.constant 0 : index
    %c0_4 = arith.constant 0 : index
    %5 = vector.load %arg3[%c0_3, %c0_4] : memref<4x32xf32, #tpu.memory_space<vmem>>, vector<4x32xf32>
    %cst = arith.constant dense<0.000000e+00> : vector<256x32xf32>
    %6 = tpu.matmul %4, %5, %cst {dimension_numbers = #tpu.dot_dimension_numbers<[1], [0], [0], [1], [0, 0, 1, 1], [], []>} : vector<256x4xf32>, vector<4x32xf32>, vector<256x32xf32> -> vector<256x32xf32>
    %c0_5 = arith.constant 0 : index
    %c0_6 = arith.constant 0 : index
    %7 = vector.load %arg4[%c0_5, %c0_6] : memref<1x32xf32, #tpu.memory_space<vmem>>, vector<1x32xf32>
    %8 = vector.broadcast %7 : vector<1x32xf32> to vector<256x32xf32>
    %9 = arith.addf %6, %8 : vector<256x32xf32>
    %c0_7 = arith.constant 0 : index
    %c0_8 = arith.constant 0 : index
    %c0_9 = arith.constant 0 : index
    %10 = vector.load %arg5[%c0_7, %c0_8, %c0_9] : memref<1x256x32xf32, #tpu.memory_space<vmem>>, vector<1x256x32xf32>
    %11 = vector.shape_cast %10 : vector<1x256x32xf32> to vector<256x32xf32>
    %12 = vector.shape_cast %9 : vector<256x32xf32> to vector<1x256x32xf32>
    tpu.vector_store %arg5[%c0_7, %c0_8, %c0_9], %12 {strides = array<i32>} : memref<1x256x32xf32, #tpu.memory_space<vmem>>, vector<1x256x32xf32>,
    %c0_10 = arith.constant 0 : index
    %c0_11 = arith.constant 0 : index
    %13 = vector.load %arg8[%c0_10, %c0_11] : memref<1x32xf32, #tpu.memory_space<vmem>>, vector<1x32xf32>
    %cst_12 = arith.constant dense<0.000000e+00> : vector<32xf32>
    %14 = vector.multi_reduction <add>, %9, %cst_12 [0] : vector<256x32xf32> to vector<32xf32>
    %15 = vector.shape_cast %14 : vector<32xf32> to vector<1x32xf32>
    %16 = arith.addf %13, %15 : vector<1x32xf32>
    %c0_13 = arith.constant 0 : index
    %c0_14 = arith.constant 0 : index
    %17 = vector.load %arg8[%c0_13, %c0_14] : memref<1x32xf32, #tpu.memory_space<vmem>>, vector<1x32xf32>
    tpu.vector_store %arg8[%c0_13, %c0_14], %16 {strides = array<i32>} : memref<1x32xf32, #tpu.memory_space<vmem>>, vector<1x32xf32>,
    %c0_15 = arith.constant 0 : index
    %c0_16 = arith.constant 0 : index
    %18 = vector.load %arg9[%c0_15, %c0_16] : memref<1x32xf32, #tpu.memory_space<vmem>>, vector<1x32xf32>
    %19 = arith.mulf %9, %9 : vector<256x32xf32>
    %cst_17 = arith.constant dense<0.000000e+00> : vector<32xf32>
    %20 = vector.multi_reduction <add>, %19, %cst_17 [0] : vector<256x32xf32> to vector<32xf32>
    %21 = vector.shape_cast %20 : vector<32xf32> to vector<1x32xf32>
    %22 = arith.addf %18, %21 : vector<1x32xf32>
    %c0_18 = arith.constant 0 : index
    %c0_19 = arith.constant 0 : index
    %23 = vector.load %arg9[%c0_18, %c0_19] : memref<1x32xf32, #tpu.memory_space<vmem>>, vector<1x32xf32>
    tpu.vector_store %arg9[%c0_18, %c0_19], %22 {strides = array<i32>} : memref<1x32xf32, #tpu.memory_space<vmem>>, vector<1x32xf32>,
    %c0_i32_20 = arith.constant 0 : i32
    %24 = arith.cmpi eq, %arg1, %c0_i32_20 : i32
    %25 = arith.extui %24 : i1 to i32
    %c0_i32_21 = arith.constant 0 : i32
    %26 = arith.cmpi ne, %25, %c0_i32_21 : i32
    scf.if %26 {
      %c0_22 = arith.constant 0 : index
      %c0_23 = arith.constant 0 : index
      %27 = vector.load %arg8[%c0_22, %c0_23] : memref<1x32xf32, #tpu.memory_space<vmem>>, vector<1x32xf32>
      %cst_24 = arith.constant 3.906250e-03 : f32
      %28 = vector.broadcast %cst_24 : f32 to vector<1x32xf32>
      %29 = arith.mulf %27, %28 : vector<1x32xf32>
      %c0_25 = arith.constant 0 : index
      %c0_26 = arith.constant 0 : index
      %30 = vector.load %arg9[%c0_25, %c0_26] : memref<1x32xf32, #tpu.memory_space<vmem>>, vector<1x32xf32>
      %cst_27 = arith.constant 3.906250e-03 : f32
      %31 = vector.broadcast %cst_27 : f32 to vector<1x32xf32>
      %32 = arith.mulf %30, %31 : vector<1x32xf32>
      %33 = arith.mulf %29, %29 : vector<1x32xf32>
      %34 = arith.subf %32, %33 : vector<1x32xf32>
      %c0_28 = arith.constant 0 : index
      %c0_29 = arith.constant 0 : index
      %c0_30 = arith.constant 0 : index
      %35 = vector.load %arg6[%c0_28, %c0_29, %c0_30] : memref<1x1x32xf32, #tpu.memory_space<vmem>>, vector<1x1x32xf32>
      %36 = vector.shape_cast %35 : vector<1x1x32xf32> to vector<1x32xf32>
      %37 = vector.shape_cast %29 : vector<1x32xf32> to vector<1x1x32xf32>
      tpu.vector_store %arg6[%c0_28, %c0_29, %c0_30], %37 {strides = array<i32>} : memref<1x1x32xf32, #tpu.memory_space<vmem>>, vector<1x1x32xf32>,
      %cst_31 = arith.constant 9.99999974E-6 : f32
      %38 = vector.broadcast %cst_31 : f32 to vector<1x32xf32>
      %39 = arith.addf %34, %38 : vector<1x32xf32>
      %40 = math.rsqrt %39 : vector<1x32xf32>
      %c0_32 = arith.constant 0 : index
      %c0_33 = arith.constant 0 : index
      %c0_34 = arith.constant 0 : index
      %41 = vector.load %arg7[%c0_32, %c0_33, %c0_34] : memref<1x1x32xf32, #tpu.memory_space<vmem>>, vector<1x1x32xf32>
      %42 = vector.shape_cast %41 : vector<1x1x32xf32> to vector<1x32xf32>
      %43 = vector.shape_cast %40 : vector<1x32xf32> to vector<1x1x32xf32>
      tpu.vector_store %arg7[%c0_32, %c0_33, %c0_34], %43 {strides = array<i32>} : memref<1x1x32xf32, #tpu.memory_space<vmem>>, vector<1x1x32xf32>,
    } else {
    }
    return
  }
  func.func @transform_0(%arg0: i32, %arg1: i32) -> (i32, i32, i32) {
    %c0_i32 = arith.constant 0 : i32
    %c0_i32_0 = arith.constant 0 : i32
    return %arg0, %arg1, %c0_i32 : i32, i32, i32
  }
  func.func @transform_1(%arg0: i32, %arg1: i32) -> (i32, i32) {
    %c0_i32 = arith.constant 0 : i32
    %c0_i32_0 = arith.constant 0 : i32
    %c0_i32_1 = arith.constant 0 : i32
    return %c0_i32, %c0_i32_0 : i32, i32
  }
  func.func @transform_2(%arg0: i32, %arg1: i32) -> (i32, i32) {
    %c0_i32 = arith.constant 0 : i32
    %c0_i32_0 = arith.constant 0 : i32
    %c0_i32_1 = arith.constant 0 : i32
    return %c0_i32, %c0_i32_0 : i32, i32
  }
  func.func @transform_3(%arg0: i32, %arg1: i32) -> (i32, i32, i32) {
    %c0_i32 = arith.constant 0 : i32
    %c0_i32_0 = arith.constant 0 : i32
    return %arg0, %arg1, %c0_i32 : i32, i32, i32
  }
  func.func @transform_4(%arg0: i32, %arg1: i32) -> (i32, i32, i32) {
    %c0_i32 = arith.constant 0 : i32
    %c0_i32_0 = arith.constant 0 : i32
    %c0_i32_1 = arith.constant 0 : i32
    return %arg0, %c0_i32, %c0_i32_0 : i32, i32, i32
  }
  func.func @transform_5(%arg0: i32, %arg1: i32) -> (i32, i32, i32) {
    %c0_i32 = arith.constant 0 : i32
    %c0_i32_0 = arith.constant 0 : i32
    %c0_i32_1 = arith.constant 0 : i32
    return %arg0, %c0_i32, %c0_i32_0 : i32, i32, i32
  }
}

</mosaic_0001>

<llo_original>
// kernel: tpu_custom_call.1
$region0: #{tpu_custom_call.1}
  #allocation0 [shape = 'u32[]', space=smem, size = 0x4, offset = 0x4, fixed_abs, tag = 'smem constant byte address 0x4 - core index']
  #allocation1 [shape = 'u32[144,128]{1,0:T(1,128)}', space=vmem, size = 0x12000, scoped, tag = 'internal scratch']
  #allocation2 [shape = 'f32[1,32]{1,0:T(1,128)}', space=vmem, size = 0x200, scoped, tag = 'scratch operand']
  #allocation3 [shape = 'f32[1,32]{1,0:T(1,128)}', space=vmem, size = 0x200, scoped, tag = 'scratch operand']
  %s0 = inlined_call_operand.vmem [shape: f32[2,256,4], index: 0, kind: input, shape index: {}]
  %s1 = inlined_call_operand.vmem [shape: f32[4,32], index: 1, kind: input, shape index: {}]
  %s2 = inlined_call_operand.vmem [shape: f32[1,32], index: 2, kind: input, shape index: {}]
  %s3 = inlined_call_operand.vmem [shape: f32[2,256,32], index: 3, kind: output, shape index: {0}]
  %s4 = inlined_call_operand.hbm [shape: f32[2,1,32], index: 4, kind: output, shape index: {1}]
  %s5 = inlined_call_operand.hbm [shape: f32[2,1,32], index: 5, kind: output, shape index: {2}]
  %6 = xla_tuple %s3, %s4, %s5
  %s7 = sld [smem:[#allocation0]]
  $region69: #{tpu_custom_call.1} parent=0
    _
  %s9 = ssub.s32 1, %s7
  %s10 = scalar_select 0, %s9, %s7
  $region1: #{tpu_custom_call.1} parent=0
    #allocation4 [shape = 'u8[1024]{0}', space=vmem, size = 0x400, scoped, tag = 'output window, operand 1']
    #allocation5 [shape = 's32[2]{0}', space=sflag, size = 0x8, scoped, tag = 'scoped memory for tpu_custom_call.1']
    #allocation6 [shape = 'u8[1024]{0}', space=vmem, size = 0x400, scoped, tag = 'output window, operand 2']
    #allocation7 [shape = 's32[2]{0}', space=sflag, size = 0x8, scoped, tag = 'scoped memory for tpu_custom_call.1']
    %11 = vsyncpa [#allocation5], 0
    %s12 = scalar_lea.sflag [#allocation5], 1
    %13 = vsyncpa %s12, 0
    %14 = vsyncpa [#allocation7], 0
    %s15 = scalar_lea.sflag [#allocation7], 1
    %16 = vsyncpa %s15, 0
    loop: start=0, step=1, limit=4
    $region2: #{tpu_custom_call.1} parent=1 // loop_pre_header
      _
    $region3: #{tpu_custom_call.1} parent=1 // loop_header
      %s18 = sphi 0, %s22
      %p19 = scmp.ge.s32.totalorder %s18, 4
      %s25 = sphi 0, %s37
      %s26 = sphi 0, %s33
      %s27 = sphi 0, %s25
      %s28 = sphi 0, %s26
      %s29 = sphi 0, %s27
      %s30 = sphi 0, %s28
      %s42 = sphi 0, %s44
      %s45 = sphi 0, %s42
      %s46 = sphi 0, %s45
      %s62 = sphi 0, %s46
      %s66 = sphi 0, %s66
      %s68 = sphi 0, %s66
      %s69 = sphi 0, %s68
      %s83 = sphi 0, %s69
      %s87 = sphi 0, %s87
      %s89 = sphi 0, %s87
      %s90 = sphi 0, %s89
      %s104 = sphi 0, %s90
      %s112 = sphi 0, %s114
      %s115 = sphi 0, %s112
      %s116 = sphi 0, %s115
      %s132 = sphi 0, %s116
      %s138 = sphi 0, %s140
      %s141 = sphi 0, %s138
      %s142 = sphi 0, %s141
      %s158 = sphi 0, %s142
      %s164 = sphi 0, %s166
      %s167 = sphi 0, %s164
      %s168 = sphi 0, %s167
      %s184 = sphi 0, %s168
    $region4: #{tpu_custom_call.1} parent=1 // loop_header_branch
      %21 = sbr.rel (%p19) target = $region8
    $region5: #{tpu_custom_call.1} parent=1 // loop_body
      %s23 = ssub.s32 %s18, 1
      %s24 = ssub.s32 %s18, 2
      %s31 = sadd.s32 1, %s26
      %p32 = scmp.ge.s32.totalorder %s31, 1
      %s33 = scalar_select %p32, 0, %s31
      %s34 = sadd.s32 1, %s25
      %s35 = scalar_select %p32, %s34, %s25
      %p36 = scmp.ge.s32.totalorder %s35, 2
      %s37 = scalar_select %p36, 0, %s35
      %s38 = ssub.s32 %s25, %s37
      %s39 = ssub.s32 %s26, %s33
      %s40 = sor.u32 %s38, %s39
      %p41 = scmp.eq.s32.totalorder %s40, 0
      %s43 = sadd.s32 %s42, 1
      %s44 = scalar_select %p41, %s42, %s43
      %p47 = pneg %p41
      %p48 = scmp.eq.s32.totalorder %s18, 1
      %p49 = por %p47, %p48
      %p50 = scmp.ne.s32.totalorder %s42, %s45
      %p51 = scmp.eq.s32.totalorder %s18, 0
      %p52 = por %p50, %p51
      %p53 = scmp.ne.s32.totalorder %s42, %s45
      %p54 = scmp.eq.s32.totalorder %s23, 1
      %p55 = por %p53, %p54
      %p56 = scmp.ne.s32.totalorder %s45, %s46
      %p57 = scmp.eq.s32.totalorder %s23, 0
      %p58 = por %p56, %p57
      %p59 = scmp.ne.s32.totalorder %s45, %s46
      %p60 = scmp.eq.s32.totalorder %s24, 1
      %p61 = por %p59, %p60
      %p63 = scmp.ne.s32.totalorder %s46, %s62
      %p64 = scmp.eq.s32.totalorder %s24, 0
      %p65 = por %p63, %p64
      %s67 = sadd.s32 %s66, 1
      %p70 = scmp.eq.s32.totalorder %s18, 1
      %p71 = scmp.ne.s32.totalorder %s66, %s68
      %p72 = scmp.eq.s32.totalorder %s18, 0
      %p73 = por %p71, %p72
      %p74 = scmp.ne.s32.totalorder %s66, %s68
      %p75 = scmp.eq.s32.totalorder %s23, 1
      %p76 = por %p74, %p75
      %p77 = scmp.ne.s32.totalorder %s68, %s69
      %p78 = scmp.eq.s32.totalorder %s23, 0
      %p79 = por %p77, %p78
      %p80 = scmp.ne.s32.totalorder %s68, %s69
      %p81 = scmp.eq.s32.totalorder %s24, 1
      %p82 = por %p80, %p81
      %p84 = scmp.ne.s32.totalorder %s69, %s83
      %p85 = scmp.eq.s32.totalorder %s24, 0
      %p86 = por %p84, %p85
      %s88 = sadd.s32 %s87, 1
      %p91 = scmp.eq.s32.totalorder %s18, 1
      %p92 = scmp.ne.s32.totalorder %s87, %s89
      %p93 = scmp.eq.s32.totalorder %s18, 0
      %p94 = por %p92, %p93
      %p95 = scmp.ne.s32.totalorder %s87, %s89
      %p96 = scmp.eq.s32.totalorder %s23, 1
      %p97 = por %p95, %p96
      %p98 = scmp.ne.s32.totalorder %s89, %s90
      %p99 = scmp.eq.s32.totalorder %s23, 0
      %p100 = por %p98, %p99
      %p101 = scmp.ne.s32.totalorder %s89, %s90
      %p102 = scmp.eq.s32.totalorder %s24, 1
      %p103 = por %p101, %p102
      %p105 = scmp.ne.s32.totalorder %s90, %s104
      %p106 = scmp.eq.s32.totalorder %s24, 0
      %p107 = por %p105, %p106
      %s108 = ssub.s32 %s25, %s37
      %s109 = ssub.s32 %s26, %s33
      %s110 = sor.u32 %s108, %s109
      %p111 = scmp.eq.s32.totalorder %s110, 0
      %s113 = sadd.s32 %s112, 1
      %s114 = scalar_select %p111, %s112, %s113
      %p117 = pneg %p111
      %p118 = scmp.eq.s32.totalorder %s18, 1
      %p119 = por %p117, %p118
      %p120 = scmp.ne.s32.totalorder %s112, %s115
      %p121 = scmp.eq.s32.totalorder %s18, 0
      %p122 = por %p120, %p121
      %p123 = scmp.ne.s32.totalorder %s112, %s115
      %p124 = scmp.eq.s32.totalorder %s23, 1
      %p125 = por %p123, %p124
      %p126 = scmp.ne.s32.totalorder %s115, %s116
      %p127 = scmp.eq.s32.totalorder %s23, 0
      %p128 = por %p126, %p127
      %p129 = scmp.ne.s32.totalorder %s115, %s116
      %p130 = scmp.eq.s32.totalorder %s24, 1
      %p131 = por %p129, %p130
      %p133 = scmp.ne.s32.totalorder %s116, %s132
      %p134 = scmp.eq.s32.totalorder %s24, 0
      %p135 = por %p133, %p134
      %s136 = ssub.s32 %s25, %s37
      %p137 = scmp.eq.s32.totalorder %s136, 0
      %s139 = sadd.s32 %s138, 1
      %s140 = scalar_select %p137, %s138, %s139
      %p143 = pneg %p137
      %p144 = scmp.eq.s32.totalorder %s18, 1
      %p145 = por %p143, %p144
      %p146 = scmp.ne.s32.totalorder %s138, %s141
      %p147 = scmp.eq.s32.totalorder %s18, 0
      %p148 = por %p146, %p147
      %p149 = scmp.ne.s32.totalorder %s138, %s141
      %p150 = scmp.eq.s32.totalorder %s23, 1
      %p151 = por %p149, %p150
      %p152 = scmp.ne.s32.totalorder %s141, %s142
      %p153 = scmp.eq.s32.totalorder %s23, 0
      %p154 = por %p152, %p153
      %p155 = scmp.ne.s32.totalorder %s141, %s142
      %p156 = scmp.eq.s32.totalorder %s24, 1
      %p157 = por %p155, %p156
      %p159 = scmp.ne.s32.totalorder %s142, %s158
      %p160 = scmp.eq.s32.totalorder %s24, 0
      %p161 = por %p159, %p160
      %s162 = ssub.s32 %s25, %s37
      %p163 = scmp.eq.s32.totalorder %s162, 0
      %s165 = sadd.s32 %s164, 1
      %s166 = scalar_select %p163, %s164, %s165
      %p169 = pneg %p163
      %p170 = scmp.eq.s32.totalorder %s18, 1
      %p171 = por %p169, %p170
      %p172 = scmp.ne.s32.totalorder %s164, %s167
      %p173 = scmp.eq.s32.totalorder %s18, 0
      %p174 = por %p172, %p173
      %p175 = scmp.ne.s32.totalorder %s164, %s167
      %p176 = scmp.eq.s32.totalorder %s23, 1
      %p177 = por %p175, %p176
      %p178 = scmp.ne.s32.totalorder %s167, %s168
      %p179 = scmp.eq.s32.totalorder %s23, 0
      %p180 = por %p178, %p179
      %p181 = scmp.ne.s32.totalorder %s167, %s168
      %p182 = scmp.eq.s32.totalorder %s24, 1
      %p183 = por %p181, %p182
      %p185 = scmp.ne.s32.totalorder %s168, %s184
      %p186 = scmp.eq.s32.totalorder %s24, 0
      %p187 = por %p185, %p186
      %p188 = scmp.le.s32.totalorder 1, %s18
      %p189 = scmp.lt.s32.totalorder %s18, 3
      %p190 = pnand %p188, %p189
      %p191 = pneg %p190
      // Predicated region
      $region9: #{tpu_custom_call.1} parent=5 // pred_check
        _
      $region10: #{tpu_custom_call.1} parent=5 // pred_check_branch
        %193 = sbr.rel (%p190) target = $region12
      $region11: #{tpu_custom_call.1} parent=5 // pred_region
        %s194 = ssub.s32 %s18, 1
        // Predicated region
        $region13: #{tpu_custom_call.1} parent=11 // pred_check
          %p195 = pneg %p79
        $region14: #{tpu_custom_call.1} parent=11 // pred_check_branch
          %197 = sbr.rel (%p195) target = $region16
        $region15: #{tpu_custom_call.1} parent=11 // pred_region
          _
        $region16: #{tpu_custom_call.1} parent=11 // pred_fallthru
          _
        // Predicated region
        $region17: #{tpu_custom_call.1} parent=11 // pred_check
          %p198 = pneg %p100
        $region18: #{tpu_custom_call.1} parent=11 // pred_check_branch
          %200 = sbr.rel (%p198) target = $region20
        $region19: #{tpu_custom_call.1} parent=11 // pred_region
          _
        $region20: #{tpu_custom_call.1} parent=11 // pred_fallthru
          _
      $region12: #{tpu_custom_call.1} parent=5 // pred_fallthru
        _
      %p201 = scmp.lt.s32.totalorder %s18, 2
      // Predicated region
      $region21: #{tpu_custom_call.1} parent=5 // pred_check
        %p202 = pneg %p201
      $region22: #{tpu_custom_call.1} parent=5 // pred_check_branch
        %204 = sbr.rel (%p202) target = $region24
      $region23: #{tpu_custom_call.1} parent=5 // pred_region
        // Predicated region
        $region25: #{tpu_custom_call.1} parent=23 // pred_check
          %p205 = pneg %p52
        $region26: #{tpu_custom_call.1} parent=23 // pred_check_branch
          %207 = sbr.rel (%p205) target = $region28
        $region27: #{tpu_custom_call.1} parent=23 // pred_region
          %s208 = smul.u32 32, %s26
          %p209 = scmp.lt.s32.totalorder %s25, 1
          %s210 = scalar_select %p209, %s25, 1
          %p211 = scmp.lt.s32.totalorder %s208, 31
          %s212 = scalar_select %p211, %s208, 31
          %s213 = smul.addr %s210, 32
          %s214 = sadd.s32 %s212, %s213
          %s215 = smul.addr %s214, 8
          %s216 = scalar_lea.vmem %s0, %s215
          %s217 = smul.u32 32, %s26
        $region28: #{tpu_custom_call.1} parent=23 // pred_fallthru
          _
      $region24: #{tpu_custom_call.1} parent=5 // pred_fallthru
        _
      %p218 = scmp.le.s32.totalorder 1, %s18
      %p219 = scmp.lt.s32.totalorder %s18, 3
      %p220 = pnand %p218, %p219
      %p221 = pneg %p220
      // Predicated region
      $region29: #{tpu_custom_call.1} parent=5 // pred_check
        _
      $region30: #{tpu_custom_call.1} parent=5 // pred_check_branch
        %223 = sbr.rel (%p220) target = $region32
      $region31: #{tpu_custom_call.1} parent=5 // pred_region
        %s224 = ssub.s32 %s18, 1
        %s225 = smul.u32 32, %s28
        %p226 = scmp.lt.s32.totalorder %s27, 1
        %s227 = scalar_select %p226, %s27, 1
        %p228 = scmp.lt.s32.totalorder %s225, 31
        %s229 = scalar_select %p228, %s225, 31
        %s230 = smul.addr %s227, 32
        %s231 = sadd.s32 %s229, %s230
        %s232 = smul.addr %s231, 8
        %s233 = scalar_lea.vmem %s0, %s232
        %p234 = pneg %p58
        %p235 = pneg %p55
        %p236 = pneg %p79
        %p237 = pneg %p76
        %p238 = pneg %p100
        %p239 = pneg %p97
        %p240 = pneg %p128
        %p241 = pneg %p125
        %s242 = smul.u32 32, %s28
        %p243 = scmp.lt.s32.totalorder %s27, 1
        %s244 = scalar_select %p243, %s27, 1
        %p245 = scmp.lt.s32.totalorder %s242, 31
        %s246 = scalar_select %p245, %s242, 31
        %s247 = smul.addr %s244, 32
        %s248 = sadd.s32 %s246, %s247
        %s249 = smul.addr %s248, 8
        %s250 = scalar_lea.vmem %s3, %s249
        %p251 = pneg %p154
        %p252 = pneg %p151
        %s253 = sand.u32 %s141, 1
        %s254 = scalar_lea.sflag [#allocation5], %s253
        %s255 = sand.u32 %s141, 1
        %s256 = scalar_lea.vmem [#allocation4], %s255
        %p257 = pneg %p180
        %p258 = pneg %p177
        %s259 = sand.u32 %s167, 1
        %s260 = scalar_lea.sflag [#allocation7], %s259
        %s261 = sand.u32 %s167, 1
        %s262 = scalar_lea.vmem [#allocation6], %s261
        %s263 = smul.u32 32, %s28
        %p264 = scmp.lt.s32.totalorder %s27, 1
        %s265 = scalar_select %p264, %s27, 1
        %p266 = scmp.lt.s32.totalorder %s263, 31
        %s267 = scalar_select %p266, %s263, 31
        %s268 = smul.addr %s265, 32
        %s269 = sadd.s32 %s267, %s268
        %s270 = smul.addr %s269, 8
        %s271 = scalar_lea.vmem %s0, %s270
        %s272 = smul.u32 32, %s28
        %s273 = smul.u32 32, %s28
        %p274 = scmp.lt.s32.totalorder %s27, 1
        %s275 = scalar_select %p274, %s27, 1
        %p276 = scmp.lt.s32.totalorder %s273, 31
        %s277 = scalar_select %p276, %s273, 31
        %s278 = smul.addr %s275, 32
        %s279 = sadd.s32 %s277, %s278
        %s280 = smul.addr %s279, 8
        %s281 = scalar_lea.vmem %s3, %s280
        %s282 = smul.u32 32, %s28
        %p283 = scmp.eq.s32.totalorder %s28, 0
        // Predicated region
        $region33: #{tpu_custom_call.1} parent=31 // pred_check
          %p284 = pneg %p283
        $region34: #{tpu_custom_call.1} parent=31 // pred_check_branch
          %286 = sbr.rel (%p284) target = $region36
        $region35: #{tpu_custom_call.1} parent=31 // pred_region
          %vm287 = vcmask 253952
          %288 = vst.msk [vmem:[#allocation2] sm:$0x1] %vm287, 0.0
          %289 = vst.msk [vmem:[#allocation3] sm:$0x1] %vm287, 0.0
        $region36: #{tpu_custom_call.1} parent=31 // pred_fallthru
          _
        %v290 = vld [vmem:[%s271] sm:$0xff]
        %v291 = vld [vmem:[%s271 + $0x8] sm:$0xff]
        %v292 = vld [vmem:[%s271 + $0x10] sm:$0xff]
        %v293 = vld [vmem:[%s271 + $0x18] sm:$0xff]
        %v294 = vld [vmem:[%s271 + $0x20] sm:$0xff]
        %v295 = vld [vmem:[%s271 + $0x28] sm:$0xff]
        %v296 = vld [vmem:[%s271 + $0x30] sm:$0xff]
        %v297 = vld [vmem:[%s271 + $0x38] sm:$0xff]
        %v298 = vld [vmem:[%s271 + $0x40] sm:$0xff]
        %v299 = vld [vmem:[%s271 + $0x48] sm:$0xff]
        %v300 = vld [vmem:[%s271 + $0x50] sm:$0xff]
        %v301 = vld [vmem:[%s271 + $0x58] sm:$0xff]
        %v302 = vld [vmem:[%s271 + $0x60] sm:$0xff]
        %v303 = vld [vmem:[%s271 + $0x68] sm:$0xff]
        %v304 = vld [vmem:[%s271 + $0x70] sm:$0xff]
        %v305 = vld [vmem:[%s271 + $0x78] sm:$0xff]
        %v306 = vld [vmem:[%s271 + $0x80] sm:$0xff]
        %v307 = vld [vmem:[%s271 + $0x88] sm:$0xff]
        %v308 = vld [vmem:[%s271 + $0x90] sm:$0xff]
        %v309 = vld [vmem:[%s271 + $0x98] sm:$0xff]
        %v310 = vld [vmem:[%s271 + $0xa0] sm:$0xff]
        %v311 = vld [vmem:[%s271 + $0xa8] sm:$0xff]
        %v312 = vld [vmem:[%s271 + $0xb0] sm:$0xff]
        %v313 = vld [vmem:[%s271 + $0xb8] sm:$0xff]
        %v314 = vld [vmem:[%s271 + $0xc0] sm:$0xff]
        %v315 = vld [vmem:[%s271 + $0xc8] sm:$0xff]
        %v316 = vld [vmem:[%s271 + $0xd0] sm:$0xff]
        %v317 = vld [vmem:[%s271 + $0xd8] sm:$0xff]
        %v318 = vld [vmem:[%s271 + $0xe0] sm:$0xff]
        %v319 = vld [vmem:[%s271 + $0xe8] sm:$0xff]
        %v320 = vld [vmem:[%s271 + $0xf0] sm:$0xff]
        %v321 = vld [vmem:[%s271 + $0xf8] sm:$0xff]
        %v322 = vld [vmem:[%s1] sm:$0xf]
        %v323 = vld [vmem:[%s2] sm:$0x1]
        %v325 = vlaneseq
        %v326 = vshrl.u32 %v325, 7
        %v327 = vsub.s32 0, %v326
        %v328 = vrot.slane %v323, %v327
        %vm330 = vcmask 31744
        %v332 = vsel %vm330, %v290, 0
        %v335 = vsel %vm330, %v291, 0
        %v338 = vsel %vm330, %v292, 0
        %v341 = vsel %vm330, %v293, 0
        %v344 = vsel %vm330, %v294, 0
        %v347 = vsel %vm330, %v295, 0
        %v350 = vsel %vm330, %v296, 0
        %v353 = vsel %vm330, %v297, 0
        %v356 = vsel %vm330, %v298, 0
        %v359 = vsel %vm330, %v299, 0
        %v362 = vsel %vm330, %v300, 0
        %v365 = vsel %vm330, %v301, 0
        %v368 = vsel %vm330, %v302, 0
        %v371 = vsel %vm330, %v303, 0
        %v374 = vsel %vm330, %v304, 0
        %v377 = vsel %vm330, %v305, 0
        %v380 = vsel %vm330, %v306, 0
        %v383 = vsel %vm330, %v307, 0
        %v386 = vsel %vm330, %v308, 0
        %v389 = vsel %vm330, %v309, 0
        %v392 = vsel %vm330, %v310, 0
        %v395 = vsel %vm330, %v311, 0
        %v398 = vsel %vm330, %v312, 0
        %v401 = vsel %vm330, %v313, 0
        %v404 = vsel %vm330, %v314, 0
        %v407 = vsel %vm330, %v315, 0
        %v410 = vsel %vm330, %v316, 0
        %v413 = vsel %vm330, %v317, 0
        %v416 = vsel %vm330, %v318, 0
        %v419 = vsel %vm330, %v319, 0
        %v422 = vsel %vm330, %v320, 0
        %v425 = vsel %vm330, %v321, 0
        %vm427 = vcmask 1043456
        %v429 = vsel %vm427, %v322, 0
        %431 = vmatprep.subr.mxu0 0.0
        %432 = vmatpush1.msra.mxu0 %v429
        %433 = vmatprep.subr.mxu0 0.0
        %434 = vmatpush1.msra.mxu0 0.0
        %435 = vmatprep.subr.mxu0 0.0
        %436 = vmatpush1.msra.mxu0 0.0
        %437 = vmatprep.subr.mxu0 0.0
        %438 = vmatpush1.msra.mxu0 0.0
        %439 = vmatprep.subr.mxu0 0.0
        %440 = vmatpush1.msra.mxu0 0.0
        %441 = vmatprep.subr.mxu0 0.0
        %442 = vmatpush1.msra.mxu0 0.0
        %443 = vmatprep.subr.mxu0 0.0
        %444 = vmatpush1.msra.mxu0 0.0
        %445 = vmatprep.subr.mxu0 0.0
        %446 = vmatpush1.msra.mxu0 0.0
        %447 = vmatprep.subr.mxu0 0.0
        %448 = vmatpush1.msra.mxu0 0.0
        %449 = vmatprep.subr.mxu0 0.0
        %450 = vmatpush1.msra.mxu0 0.0
        %451 = vmatprep.subr.mxu0 0.0
        %452 = vmatpush1.msra.mxu0 0.0
        %453 = vmatprep.subr.mxu0 0.0
        %454 = vmatpush1.msra.mxu0 0.0
        %455 = vmatprep.subr.mxu0 0.0
        %456 = vmatpush1.msra.mxu0 0.0
        %457 = vmatprep.subr.mxu0 0.0
        %458 = vmatpush1.msra.mxu0 0.0
        %459 = vmatprep.subr.mxu0 0.0
        %460 = vmatpush1.msra.mxu0 0.0
        %461 = vmatprep.subr.mxu0 0.0
        %462 = vmatpush1.msra.mxu0 0.0
        %463 = vmatprep.subr.mxu0 0.0
        %464 = vmatpush1.msra.mxu0 0.0
        %465 = vmatprep.subr.mxu0 0.0
        %466 = vmatpush1.msra.mxu0 0.0
        %467 = vmatprep.subr.mxu0 0.0
        %468 = vmatpush1.msra.mxu0 0.0
        %469 = vmatprep.subr.mxu0 0.0
        %470 = vmatpush1.msra.mxu0 0.0
        %471 = vmatprep.subr.mxu0 0.0
        %472 = vmatpush1.msra.mxu0 0.0
        %473 = vmatprep.subr.mxu0 0.0
        %474 = vmatpush1.msra.mxu0 0.0
        %475 = vmatprep.subr.mxu0 0.0
        %476 = vmatpush1.msra.mxu0 0.0
        %477 = vmatprep.subr.mxu0 0.0
        %478 = vmatpush1.msra.mxu0 0.0
        %479 = vmatprep.subr.mxu0 0.0
        %480 = vmatpush1.msra.mxu0 0.0
        %481 = vmatprep.subr.mxu0 0.0
        %482 = vmatpush1.msra.mxu0 0.0
        %483 = vmatprep.subr.mxu0 0.0
        %484 = vmatpush1.msra.mxu0 0.0
        %485 = vmatprep.subr.mxu0 0.0
        %486 = vmatpush1.msra.mxu0 0.0
        %487 = vmatprep.subr.mxu0 0.0
        %488 = vmatpush1.msra.mxu0 0.0
        %489 = vmatprep.subr.mxu0 0.0
        %490 = vmatpush1.msra.mxu0 0.0
        %491 = vmatprep.subr.mxu0 0.0
        %492 = vmatpush1.msra.mxu0 0.0
        %493 = vmatprep.subr.mxu0 0.0
        %494 = vmatpush1.msra.mxu0 0.0
        %495 = vmatprep.mubr.f32.mxu0 0.0
        %496 = vmatmul.mubr.f32.gmra.mrb[0].mxu0 %v332
        %v497 = vpop.f32.mrb[0].mxu0
        %v498 = vadd.f32 %v328, %v497
        %v499 = vpop.f32.mrb[0].mxu0
        %500 = vmatprep.mubr.f32.mxu0 0.0
        %501 = vmatmul.mubr.f32.gmra.mrb[0].mxu0 %v335
        %v502 = vpop.f32.mrb[0].mxu0
        %v503 = vadd.f32 %v328, %v502
        %v504 = vpop.f32.mrb[0].mxu0
        %505 = vmatprep.mubr.f32.mxu0 0.0
        %506 = vmatmul.mubr.f32.gmra.mrb[0].mxu0 %v338
        %v507 = vpop.f32.mrb[0].mxu0
        %v508 = vadd.f32 %v328, %v507
        %v509 = vpop.f32.mrb[0].mxu0
        %510 = vmatprep.mubr.f32.mxu0 0.0
        %511 = vmatmul.mubr.f32.gmra.mrb[0].mxu0 %v341
        %v512 = vpop.f32.mrb[0].mxu0
        %v513 = vadd.f32 %v328, %v512
        %v514 = vpop.f32.mrb[0].mxu0
        %515 = vmatprep.mubr.f32.mxu0 0.0
        %516 = vmatmul.mubr.f32.gmra.mrb[0].mxu0 %v344
        %v517 = vpop.f32.mrb[0].mxu0
        %v518 = vadd.f32 %v328, %v517
        %v519 = vpop.f32.mrb[0].mxu0
        %520 = vmatprep.mubr.f32.mxu0 0.0
        %521 = vmatmul.mubr.f32.gmra.mrb[0].mxu0 %v347
        %v522 = vpop.f32.mrb[0].mxu0
        %v523 = vadd.f32 %v328, %v522
        %v524 = vpop.f32.mrb[0].mxu0
        %525 = vmatprep.mubr.f32.mxu0 0.0
        %526 = vmatmul.mubr.f32.gmra.mrb[0].mxu0 %v350
        %v527 = vpop.f32.mrb[0].mxu0
        %v528 = vadd.f32 %v328, %v527
        %v529 = vpop.f32.mrb[0].mxu0
        %530 = vmatprep.mubr.f32.mxu0 0.0
        %531 = vmatmul.mubr.f32.gmra.mrb[0].mxu0 %v353
        %v532 = vpop.f32.mrb[0].mxu0
        %v533 = vadd.f32 %v328, %v532
        %v534 = vpop.f32.mrb[0].mxu0
        %535 = vmatprep.mubr.f32.mxu0 0.0
        %536 = vmatmul.mubr.f32.gmra.mrb[0].mxu0 %v356
        %v537 = vpop.f32.mrb[0].mxu0
        %v538 = vadd.f32 %v328, %v537
        %v539 = vpop.f32.mrb[0].mxu0
        %540 = vmatprep.mubr.f32.mxu0 0.0
        %541 = vmatmul.mubr.f32.gmra.mrb[0].mxu0 %v359
        %v542 = vpop.f32.mrb[0].mxu0
        %v543 = vadd.f32 %v328, %v542
        %v544 = vpop.f32.mrb[0].mxu0
        %545 = vmatprep.mubr.f32.mxu0 0.0
        %546 = vmatmul.mubr.f32.gmra.mrb[0].mxu0 %v362
        %v547 = vpop.f32.mrb[0].mxu0
        %v548 = vadd.f32 %v328, %v547
        %v549 = vpop.f32.mrb[0].mxu0
        %550 = vmatprep.mubr.f32.mxu0 0.0
        %551 = vmatmul.mubr.f32.gmra.mrb[0].mxu0 %v365
        %v552 = vpop.f32.mrb[0].mxu0
        %v553 = vadd.f32 %v328, %v552
        %v554 = vpop.f32.mrb[0].mxu0
        %555 = vmatprep.mubr.f32.mxu0 0.0
        %556 = vmatmul.mubr.f32.gmra.mrb[0].mxu0 %v368
        %v557 = vpop.f32.mrb[0].mxu0
        %v558 = vadd.f32 %v328, %v557
        %v559 = vpop.f32.mrb[0].mxu0
        %560 = vmatprep.mubr.f32.mxu0 0.0
        %561 = vmatmul.mubr.f32.gmra.mrb[0].mxu0 %v371
        %v562 = vpop.f32.mrb[0].mxu0
        %v563 = vadd.f32 %v328, %v562
        %v564 = vpop.f32.mrb[0].mxu0
        %565 = vmatprep.mubr.f32.mxu0 0.0
        %566 = vmatmul.mubr.f32.gmra.mrb[0].mxu0 %v374
        %v567 = vpop.f32.mrb[0].mxu0
        %v568 = vadd.f32 %v328, %v567
        %v569 = vpop.f32.mrb[0].mxu0
        %570 = vmatprep.mubr.f32.mxu0 0.0
        %571 = vmatmul.mubr.f32.gmra.mrb[0].mxu0 %v377
        %v572 = vpop.f32.mrb[0].mxu0
        %v573 = vadd.f32 %v328, %v572
        %v574 = vpop.f32.mrb[0].mxu0
        %575 = vmatprep.mubr.f32.mxu0 0.0
        %576 = vmatmul.mubr.f32.gmra.mrb[0].mxu0 %v380
        %v577 = vpop.f32.mrb[0].mxu0
        %v578 = vadd.f32 %v328, %v577
        %v579 = vpop.f32.mrb[0].mxu0
        %580 = vmatprep.mubr.f32.mxu0 0.0
        %581 = vmatmul.mubr.f32.gmra.mrb[0].mxu0 %v383
        %v582 = vpop.f32.mrb[0].mxu0
        %v583 = vadd.f32 %v328, %v582
        %v584 = vpop.f32.mrb[0].mxu0
        %585 = vmatprep.mubr.f32.mxu0 0.0
        %586 = vmatmul.mubr.f32.gmra.mrb[0].mxu0 %v386
        %v587 = vpop.f32.mrb[0].mxu0
        %v588 = vadd.f32 %v328, %v587
        %v589 = vpop.f32.mrb[0].mxu0
        %590 = vmatprep.mubr.f32.mxu0 0.0
        %591 = vmatmul.mubr.f32.gmra.mrb[0].mxu0 %v389
        %v592 = vpop.f32.mrb[0].mxu0
        %v593 = vadd.f32 %v328, %v592
        %v594 = vpop.f32.mrb[0].mxu0
        %595 = vmatprep.mubr.f32.mxu0 0.0
        %596 = vmatmul.mubr.f32.gmra.mrb[0].mxu0 %v392
        %v597 = vpop.f32.mrb[0].mxu0
        %v598 = vadd.f32 %v328, %v597
        %v599 = vpop.f32.mrb[0].mxu0
        %600 = vmatprep.mubr.f32.mxu0 0.0
        %601 = vmatmul.mubr.f32.gmra.mrb[0].mxu0 %v395
        %v602 = vpop.f32.mrb[0].mxu0
        %v603 = vadd.f32 %v328, %v602
        %v604 = vpop.f32.mrb[0].mxu0
        %605 = vmatprep.mubr.f32.mxu0 0.0
        %606 = vmatmul.mubr.f32.gmra.mrb[0].mxu0 %v398
        %v607 = vpop.f32.mrb[0].mxu0
        %v608 = vadd.f32 %v328, %v607
        %v609 = vpop.f32.mrb[0].mxu0
        %610 = vmatprep.mubr.f32.mxu0 0.0
        %611 = vmatmul.mubr.f32.gmra.mrb[0].mxu0 %v401
        %v612 = vpop.f32.mrb[0].mxu0
        %v613 = vadd.f32 %v328, %v612
        %v614 = vpop.f32.mrb[0].mxu0
        %615 = vmatprep.mubr.f32.mxu0 0.0
        %616 = vmatmul.mubr.f32.gmra.mrb[0].mxu0 %v404
        %v617 = vpop.f32.mrb[0].mxu0
        %v618 = vadd.f32 %v328, %v617
        %v619 = vpop.f32.mrb[0].mxu0
        %620 = vmatprep.mubr.f32.mxu0 0.0
        %621 = vmatmul.mubr.f32.gmra.mrb[0].mxu0 %v407
        %v622 = vpop.f32.mrb[0].mxu0
        %v623 = vadd.f32 %v328, %v622
        %v624 = vpop.f32.mrb[0].mxu0
        %625 = vmatprep.mubr.f32.mxu0 0.0
        %626 = vmatmul.mubr.f32.gmra.mrb[0].mxu0 %v410
        %v627 = vpop.f32.mrb[0].mxu0
        %v628 = vadd.f32 %v328, %v627
        %v629 = vpop.f32.mrb[0].mxu0
        %630 = vmatprep.mubr.f32.mxu0 0.0
        %631 = vmatmul.mubr.f32.gmra.mrb[0].mxu0 %v413
        %v632 = vpop.f32.mrb[0].mxu0
        %v633 = vadd.f32 %v328, %v632
        %v634 = vpop.f32.mrb[0].mxu0
        %635 = vmatprep.mubr.f32.mxu0 0.0
        %636 = vmatmul.mubr.f32.gmra.mrb[0].mxu0 %v416
        %v637 = vpop.f32.mrb[0].mxu0
        %v638 = vadd.f32 %v328, %v637
        %v639 = vpop.f32.mrb[0].mxu0
        %640 = vmatprep.mubr.f32.mxu0 0.0
        %641 = vmatmul.mubr.f32.gmra.mrb[0].mxu0 %v419
        %v642 = vpop.f32.mrb[0].mxu0
        %v643 = vadd.f32 %v328, %v642
        %v644 = vpop.f32.mrb[0].mxu0
        %645 = vmatprep.mubr.f32.mxu0 0.0
        %646 = vmatmul.mubr.f32.gmra.mrb[0].mxu0 %v422
        %v647 = vpop.f32.mrb[0].mxu0
        %v648 = vadd.f32 %v328, %v647
        %v649 = vpop.f32.mrb[0].mxu0
        %650 = vmatprep.mubr.f32.mxu0 0.0
        %651 = vmatmul.mubr.f32.gmra.mrb[0].mxu0 %v425
        %v652 = vpop.f32.mrb[0].mxu0
        %v653 = vadd.f32 %v328, %v652
        %v654 = vpop.f32.mrb[0].mxu0
        %655 = vdwg.mxu0
        %vm656 = vcmask 261120
        %657 = vst.msk [vmem:[%s281] sm:$0xff] %vm656, %v498
        %658 = vst.msk [vmem:[%s281 + $0x8] sm:$0xff] %vm656, %v503
        %659 = vst.msk [vmem:[%s281 + $0x10] sm:$0xff] %vm656, %v508
        %660 = vst.msk [vmem:[%s281 + $0x18] sm:$0xff] %vm656, %v513
        %661 = vst.msk [vmem:[%s281 + $0x20] sm:$0xff] %vm656, %v518
        %662 = vst.msk [vmem:[%s281 + $0x28] sm:$0xff] %vm656, %v523
        %663 = vst.msk [vmem:[%s281 + $0x30] sm:$0xff] %vm656, %v528
        %664 = vst.msk [vmem:[%s281 + $0x38] sm:$0xff] %vm656, %v533
        %665 = vst.msk [vmem:[%s281 + $0x40] sm:$0xff] %vm656, %v538
        %666 = vst.msk [vmem:[%s281 + $0x48] sm:$0xff] %vm656, %v543
        %667 = vst.msk [vmem:[%s281 + $0x50] sm:$0xff] %vm656, %v548
        %668 = vst.msk [vmem:[%s281 + $0x58] sm:$0xff] %vm656, %v553
        %669 = vst.msk [vmem:[%s281 + $0x60] sm:$0xff] %vm656, %v558
        %670 = vst.msk [vmem:[%s281 + $0x68] sm:$0xff] %vm656, %v563
        %671 = vst.msk [vmem:[%s281 + $0x70] sm:$0xff] %vm656, %v568
        %672 = vst.msk [vmem:[%s281 + $0x78] sm:$0xff] %vm656, %v573
        %673 = vst.msk [vmem:[%s281 + $0x80] sm:$0xff] %vm656, %v578
        %674 = vst.msk [vmem:[%s281 + $0x88] sm:$0xff] %vm656, %v583
        %675 = vst.msk [vmem:[%s281 + $0x90] sm:$0xff] %vm656, %v588
        %676 = vst.msk [vmem:[%s281 + $0x98] sm:$0xff] %vm656, %v593
        %677 = vst.msk [vmem:[%s281 + $0xa0] sm:$0xff] %vm656, %v598
        %678 = vst.msk [vmem:[%s281 + $0xa8] sm:$0xff] %vm656, %v603
        %679 = vst.msk [vmem:[%s281 + $0xb0] sm:$0xff] %vm656, %v608
        %680 = vst.msk [vmem:[%s281 + $0xb8] sm:$0xff] %vm656, %v613
        %681 = vst.msk [vmem:[%s281 + $0xc0] sm:$0xff] %vm656, %v618
        %682 = vst.msk [vmem:[%s281 + $0xc8] sm:$0xff] %vm656, %v623
        %683 = vst.msk [vmem:[%s281 + $0xd0] sm:$0xff] %vm656, %v628
        %684 = vst.msk [vmem:[%s281 + $0xd8] sm:$0xff] %vm656, %v633
        %685 = vst.msk [vmem:[%s281 + $0xe0] sm:$0xff] %vm656, %v638
        %686 = vst.msk [vmem:[%s281 + $0xe8] sm:$0xff] %vm656, %v643
        %687 = vst.msk [vmem:[%s281 + $0xf0] sm:$0xff] %vm656, %v648
        %688 = vst.msk [vmem:[%s281 + $0xf8] sm:$0xff] %vm656, %v653
        %v689 = vld [vmem:[#allocation2] sm:$0x1]
        %v690 = vsel %vm656, %v498, 0.0
        %v691 = vsel %vm656, %v503, 0.0
        %v692 = vadd.f32 %v690, %v691
        %v693 = vsel %vm656, %v508, 0.0
        %v694 = vadd.f32 %v692, %v693
        %v695 = vsel %vm656, %v513, 0.0
        %v696 = vadd.f32 %v694, %v695
        %v697 = vsel %vm656, %v518, 0.0
        %v698 = vadd.f32 %v696, %v697
        %v699 = vsel %vm656, %v523, 0.0
        %v700 = vadd.f32 %v698, %v699
        %v701 = vsel %vm656, %v528, 0.0
        %v702 = vadd.f32 %v700, %v701
        %v703 = vsel %vm656, %v533, 0.0
        %v704 = vadd.f32 %v702, %v703
        %v705 = vsel %vm656, %v538, 0.0
        %v706 = vadd.f32 %v704, %v705
        %v707 = vsel %vm656, %v543, 0.0
        %v708 = vadd.f32 %v706, %v707
        %v709 = vsel %vm656, %v548, 0.0
        %v710 = vadd.f32 %v708, %v709
        %v711 = vsel %vm656, %v553, 0.0
        %v712 = vadd.f32 %v710, %v711
        %v713 = vsel %vm656, %v558, 0.0
        %v714 = vadd.f32 %v712, %v713
        %v715 = vsel %vm656, %v563, 0.0
        %v716 = vadd.f32 %v714, %v715
        %v717 = vsel %vm656, %v568, 0.0
        %v718 = vadd.f32 %v716, %v717
        %v719 = vsel %vm656, %v573, 0.0
        %v720 = vadd.f32 %v718, %v719
        %v721 = vsel %vm656, %v578, 0.0
        %v722 = vadd.f32 %v720, %v721
        %v723 = vsel %vm656, %v583, 0.0
        %v724 = vadd.f32 %v722, %v723
        %v725 = vsel %vm656, %v588, 0.0
        %v726 = vadd.f32 %v724, %v725
        %v727 = vsel %vm656, %v593, 0.0
        %v728 = vadd.f32 %v726, %v727
        %v729 = vsel %vm656, %v598, 0.0
        %v730 = vadd.f32 %v728, %v729
        %v731 = vsel %vm656, %v603, 0.0
        %v732 = vadd.f32 %v730, %v731
        %v733 = vsel %vm656, %v608, 0.0
        %v734 = vadd.f32 %v732, %v733
        %v735 = vsel %vm656, %v613, 0.0
        %v736 = vadd.f32 %v734, %v735
        %v737 = vsel %vm656, %v618, 0.0
        %v738 = vadd.f32 %v736, %v737
        %v739 = vsel %vm656, %v623, 0.0
        %v740 = vadd.f32 %v738, %v739
        %v741 = vsel %vm656, %v628, 0.0
        %v742 = vadd.f32 %v740, %v741
        %v743 = vsel %vm656, %v633, 0.0
        %v744 = vadd.f32 %v742, %v743
        %v745 = vsel %vm656, %v638, 0.0
        %v746 = vadd.f32 %v744, %v745
        %v747 = vsel %vm656, %v643, 0.0
        %v748 = vadd.f32 %v746, %v747
        %v749 = vsel %vm656, %v648, 0.0
        %v750 = vadd.f32 %v748, %v749
        %v751 = vsel %vm656, %v653, 0.0
        %v752 = vadd.f32 %v750, %v751
        %v753 = vrot.slane %v752, 4
        %v754 = vadd.f32 %v752, %v753
        %v755 = vrot.slane %v754, 2
        %v756 = vadd.f32 %v754, %v755
        %v757 = vrot.slane %v756, 1
        %v758 = vadd.f32 %v756, %v757
        %v759 = vadd.f32 %v689, %v758
        %vm760 = vcmask 253952
        %761 = vst.msk [vmem:[#allocation2] sm:$0x1] %vm760, %v759
        %v762 = vld [vmem:[#allocation3] sm:$0x1]
        %v763 = vmul.f32 %v498, %v498
        %v764 = vmul.f32 %v503, %v503
        %v765 = vmul.f32 %v508, %v508
        %v766 = vmul.f32 %v513, %v513
        %v767 = vmul.f32 %v518, %v518
        %v768 = vmul.f32 %v523, %v523
        %v769 = vmul.f32 %v528, %v528
        %v770 = vmul.f32 %v533, %v533
        %v771 = vmul.f32 %v538, %v538
        %v772 = vmul.f32 %v543, %v543
        %v773 = vmul.f32 %v548, %v548
        %v774 = vmul.f32 %v553, %v553
        %v775 = vmul.f32 %v558, %v558
        %v776 = vmul.f32 %v563, %v563
        %v777 = vmul.f32 %v568, %v568
        %v778 = vmul.f32 %v573, %v573
        %v779 = vmul.f32 %v578, %v578
        %v780 = vmul.f32 %v583, %v583
        %v781 = vmul.f32 %v588, %v588
        %v782 = vmul.f32 %v593, %v593
        %v783 = vmul.f32 %v598, %v598
        %v784 = vmul.f32 %v603, %v603
        %v785 = vmul.f32 %v608, %v608
        %v786 = vmul.f32 %v613, %v613
        %v787 = vmul.f32 %v618, %v618
        %v788 = vmul.f32 %v623, %v623
        %v789 = vmul.f32 %v628, %v628
        %v790 = vmul.f32 %v633, %v633
        %v791 = vmul.f32 %v638, %v638
        %v792 = vmul.f32 %v643, %v643
        %v793 = vmul.f32 %v648, %v648
        %v794 = vmul.f32 %v653, %v653
        %v795 = vsel %vm656, %v763, 0.0
        %v796 = vsel %vm656, %v764, 0.0
        %v797 = vadd.f32 %v795, %v796
        %v798 = vsel %vm656, %v765, 0.0
        %v799 = vadd.f32 %v797, %v798
        %v800 = vsel %vm656, %v766, 0.0
        %v801 = vadd.f32 %v799, %v800
        %v802 = vsel %vm656, %v767, 0.0
        %v803 = vadd.f32 %v801, %v802
        %v804 = vsel %vm656, %v768, 0.0
        %v805 = vadd.f32 %v803, %v804
        %v806 = vsel %vm656, %v769, 0.0
        %v807 = vadd.f32 %v805, %v806
        %v808 = vsel %vm656, %v770, 0.0
        %v809 = vadd.f32 %v807, %v808
        %v810 = vsel %vm656, %v771, 0.0
        %v811 = vadd.f32 %v809, %v810
        %v812 = vsel %vm656, %v772, 0.0
        %v813 = vadd.f32 %v811, %v812
        %v814 = vsel %vm656, %v773, 0.0
        %v815 = vadd.f32 %v813, %v814
        %v816 = vsel %vm656, %v774, 0.0
        %v817 = vadd.f32 %v815, %v816
        %v818 = vsel %vm656, %v775, 0.0
        %v819 = vadd.f32 %v817, %v818
        %v820 = vsel %vm656, %v776, 0.0
        %v821 = vadd.f32 %v819, %v820
        %v822 = vsel %vm656, %v777, 0.0
        %v823 = vadd.f32 %v821, %v822
        %v824 = vsel %vm656, %v778, 0.0
        %v825 = vadd.f32 %v823, %v824
        %v826 = vsel %vm656, %v779, 0.0
        %v827 = vadd.f32 %v825, %v826
        %v828 = vsel %vm656, %v780, 0.0
        %v829 = vadd.f32 %v827, %v828
        %v830 = vsel %vm656, %v781, 0.0
        %v831 = vadd.f32 %v829, %v830
        %v832 = vsel %vm656, %v782, 0.0
        %v833 = vadd.f32 %v831, %v832
        %v834 = vsel %vm656, %v783, 0.0
        %v835 = vadd.f32 %v833, %v834
        %v836 = vsel %vm656, %v784, 0.0
        %v837 = vadd.f32 %v835, %v836
        %v838 = vsel %vm656, %v785, 0.0
        %v839 = vadd.f32 %v837, %v838
        %v840 = vsel %vm656, %v786, 0.0
        %v841 = vadd.f32 %v839, %v840
        %v842 = vsel %vm656, %v787, 0.0
        %v843 = vadd.f32 %v841, %v842
        %v844 = vsel %vm656, %v788, 0.0
        %v845 = vadd.f32 %v843, %v844
        %v846 = vsel %vm656, %v789, 0.0
        %v847 = vadd.f32 %v845, %v846
        %v848 = vsel %vm656, %v790, 0.0
        %v849 = vadd.f32 %v847, %v848
        %v850 = vsel %vm656, %v791, 0.0
        %v851 = vadd.f32 %v849, %v850
        %v852 = vsel %vm656, %v792, 0.0
        %v853 = vadd.f32 %v851, %v852
        %v854 = vsel %vm656, %v793, 0.0
        %v855 = vadd.f32 %v853, %v854
        %v856 = vsel %vm656, %v794, 0.0
        %v857 = vadd.f32 %v855, %v856
        %v858 = vrot.slane %v857, 4
        %v859 = vadd.f32 %v857, %v858
        %v860 = vrot.slane %v859, 2
        %v861 = vadd.f32 %v859, %v860
        %v862 = vrot.slane %v861, 1
        %v863 = vadd.f32 %v861, %v862
        %v864 = vadd.f32 %v762, %v863
        %865 = vst.msk [vmem:[#allocation3] sm:$0x1] %vm760, %v864
        // Predicated region
        $region37: #{tpu_custom_call.1} parent=31 // pred_check
          %p866 = pneg %p283
        $region38: #{tpu_custom_call.1} parent=31 // pred_check_branch
          %868 = sbr.rel (%p866) target = $region40
        $region39: #{tpu_custom_call.1} parent=31 // pred_region
          %v869 = vld [vmem:[#allocation2] sm:$0x1]
          %v870 = vmul.f32 %v869, 0.00390625
          %v871 = vld [vmem:[#allocation3] sm:$0x1]
          %v872 = vmul.f32 %v871, 0.00390625
          %v873 = vmul.f32 %v870, %v870
          %v874 = vsub.f32 %v872, %v873
          %875 = vst.msk [vmem:[%s256] sm:$0x1] %vm760, %v870
          %v876 = vadd.f32 %v874, 1e-05
          %v877 = vrsqrt.pop %v876
          %878 = vst.msk [vmem:[%s262] sm:$0x1] %vm760, %v877
        $region40: #{tpu_custom_call.1} parent=31 // pred_fallthru
          _
        %s879 = smul.u32 32, %s28
        %p880 = scmp.lt.s32.totalorder %s27, 1
        %s881 = scalar_select %p880, %s27, 1
        %p882 = scmp.lt.s32.totalorder %s879, 31
        %s883 = scalar_select %p882, %s879, 31
        %s884 = smul.addr %s881, 32
        %s885 = sadd.s32 %s883, %s884
        %s886 = smul.addr %s885, 8
        %s887 = scalar_lea.vmem %s3, %s886
        %s888 = sand.u32 %s141, 1
        %s889 = scalar_lea.sflag [#allocation5], %s888
        %s890 = sand.u32 %s141, 1
        %s891 = scalar_lea.vmem [#allocation4], %s890
        %s892 = sand.u32 %s167, 1
        %s893 = scalar_lea.sflag [#allocation7], %s892
        %s894 = sand.u32 %s167, 1
        %s895 = scalar_lea.vmem [#allocation6], %s894
        // Predicated region
        $region41: #{tpu_custom_call.1} parent=31 // pred_check
          %p896 = pneg %p125
        $region42: #{tpu_custom_call.1} parent=31 // pred_check_branch
          %898 = sbr.rel (%p896) target = $region44
        $region43: #{tpu_custom_call.1} parent=31 // pred_region
          %s899 = smul.u32 32, %s28
        $region44: #{tpu_custom_call.1} parent=31 // pred_fallthru
          _
        // Predicated region
        $region45: #{tpu_custom_call.1} parent=31 // pred_check
          %p900 = pneg %p151
        $region46: #{tpu_custom_call.1} parent=31 // pred_check_branch
          %902 = sbr.rel (%p900) target = $region48
        $region47: #{tpu_custom_call.1} parent=31 // pred_region
          %s904 = ssub.s32 16, 16
          %905 = vsyncadd %s889, %s904
          %s906 = smul.addr %s27, 16
          %s907 = scalar_lea.hbm %s4, %s906
          %s909 = sshll.u32 %s891, 4
          %s910 = int_to_ptr.vmem [resolvable:$true] %s909
          %912 = dma.vmem_to_hbm [thread:$0]  %s910, 16, %s907, %s889
        $region48: #{tpu_custom_call.1} parent=31 // pred_fallthru
          _
        // Predicated region
        $region49: #{tpu_custom_call.1} parent=31 // pred_check
          %p913 = pneg %p177
        $region50: #{tpu_custom_call.1} parent=31 // pred_check_branch
          %915 = sbr.rel (%p913) target = $region52
        $region51: #{tpu_custom_call.1} parent=31 // pred_region
          %s917 = ssub.s32 16, 16
          %918 = vsyncadd %s893, %s917
          %s919 = smul.addr %s27, 16
          %s920 = scalar_lea.hbm %s5, %s919
          %s922 = sshll.u32 %s895, 4
          %s923 = int_to_ptr.vmem [resolvable:$true] %s922
          %925 = dma.vmem_to_hbm [thread:$0]  %s923, 16, %s920, %s893
        $region52: #{tpu_custom_call.1} parent=31 // pred_fallthru
          _
      $region32: #{tpu_custom_call.1} parent=5 // pred_fallthru
        _
      %p926 = scmp.le.s32.totalorder 2, %s18
      // Predicated region
      $region53: #{tpu_custom_call.1} parent=5 // pred_check
        %p927 = pneg %p926
      $region54: #{tpu_custom_call.1} parent=5 // pred_check_branch
        %929 = sbr.rel (%p927) target = $region56
      $region55: #{tpu_custom_call.1} parent=5 // pred_region
        %s930 = ssub.s32 %s18, 2
        // Predicated region
        $region57: #{tpu_custom_call.1} parent=55 // pred_check
          %p931 = pneg %p131
        $region58: #{tpu_custom_call.1} parent=55 // pred_check_branch
          %933 = sbr.rel (%p931) target = $region60
        $region59: #{tpu_custom_call.1} parent=55 // pred_region
          %s934 = smul.u32 32, %s30
          %p935 = scmp.lt.s32.totalorder %s29, 1
          %s936 = scalar_select %p935, %s29, 1
          %p937 = scmp.lt.s32.totalorder %s934, 31
          %s938 = scalar_select %p937, %s934, 31
          %s939 = smul.addr %s936, 32
          %s940 = sadd.s32 %s938, %s939
          %s941 = smul.addr %s940, 8
          %s942 = scalar_lea.vmem %s3, %s941
        $region60: #{tpu_custom_call.1} parent=55 // pred_fallthru
          _
        // Predicated region
        $region61: #{tpu_custom_call.1} parent=55 // pred_check
          %p943 = pneg %p157
        $region62: #{tpu_custom_call.1} parent=55 // pred_check_branch
          %945 = sbr.rel (%p943) target = $region64
        $region63: #{tpu_custom_call.1} parent=55 // pred_region
          %s946 = sand.u32 %s142, 1
          %s947 = scalar_lea.sflag [#allocation5], %s946
          %s948 = sand.u32 %s142, 1
          %s949 = scalar_lea.vmem [#allocation4], %s948
          %950 = dma.done %s947, 16
        $region64: #{tpu_custom_call.1} parent=55 // pred_fallthru
          _
        // Predicated region
        $region65: #{tpu_custom_call.1} parent=55 // pred_check
          %p951 = pneg %p183
        $region66: #{tpu_custom_call.1} parent=55 // pred_check_branch
          %953 = sbr.rel (%p951) target = $region68
        $region67: #{tpu_custom_call.1} parent=55 // pred_region
          %s954 = sand.u32 %s168, 1
          %s955 = scalar_lea.sflag [#allocation7], %s954
          %s956 = sand.u32 %s168, 1
          %s957 = scalar_lea.vmem [#allocation6], %s956
          %958 = dma.done %s955, 16
        $region68: #{tpu_custom_call.1} parent=55 // pred_fallthru
          _
      $region56: #{tpu_custom_call.1} parent=5 // pred_fallthru
        _
    $region6: #{tpu_custom_call.1} parent=1 // loop_footer
      %s22 = sadd.s32 1, %s18
    $region7: #{tpu_custom_call.1} parent=1 // loop_footer_branch
      %17 = sbr.rel target = $region3
    $region8: #{tpu_custom_call.1} parent=1 // loop_exit
      _
    %959 = vsyncpa [#allocation5], 1
    %s960 = scalar_lea.sflag [#allocation5], 1
    %961 = vsyncpa %s960, 1
    %962 = vsyncpa [#allocation7], 1
    %s963 = scalar_lea.sflag [#allocation7], 1
    %964 = vsyncpa %s963, 1

</llo_original>
